<compile_context>
chip_gen: v6e
topology: v6e:2x2x1
jax: 0.10.0
libtpu: 0.0.40
codegen_flags: <defaults>
</compile_context>

<pallas_src>
from functools import partial

import jax
import jax.numpy as jnp
from jax.experimental import pallas as pl
from jax.experimental.pallas import tpu as pltpu

SUBLANE = 8


def _round_up(n, m):
    return ((n + m - 1) // m) * m


def char_rnn_kernel(x_ref, rnn_ref, fc_ref, out_ref, *,
                    seq_len, batch, in_rows, hidden):
    # x_ref:   (S*Bp, I_pad)            time-major rows, Bp rows per step
    # rnn_ref: (I_pad + H + 1, H)       [W_ih^T ; W_hh^T ; b_ih+b_hh] packed
    # fc_ref:  (H + 1, O)               [W_fc^T ; b_fc] packed
    # out_ref: (Bp, O)                  f32 log-probs
    hh_off = in_rows
    b_off = in_rows + hidden

    # Static, sublane-aligned slices into the packed parameter buffers.
    w_ih = rnn_ref[0:in_rows, :]                                  # (I_pad, H)
    b_rnn = rnn_ref[b_off:b_off + 1, :].astype(jnp.float32)       # (1, H)

    # Hoisted input projection: one large MXU matmul for all timesteps
    # (bf16 x bf16 when params are stored bf16; f32 accumulation either way).
    x_proj = (jnp.dot(x_ref[...], w_ih, preferred_element_type=jnp.float32)
              + b_rnn)                                            # (S*Bp, H)

    # Recurrent weight loaded/up-cast once; kept (with h) in vregs across the
    # loop so the serial chain stays full precision.
    w_hh = rnn_ref[hh_off:hh_off + hidden, :].astype(jnp.float32)  # (H, H)

    h = jnp.zeros((batch, hidden), jnp.float32)
    # S is static and small: full unroll keeps each step's x_proj slice in
    # vregs and lets the scheduler overlap the independent work.
    # TODO(synk): for S >~ 32 use lax.fori_loop(..., unroll=4) over a VMEM
    # scratch (pl.ds slices) to bound live ranges; if the bundle dump shows a
    # per-step RHS push, stage W_hh via pltpu.matmul_push_rhs/matmul_acc_lhs.
    for t in range(seq_len):
        xp = x_proj[t * batch:(t + 1) * batch, :]                 # (Bp, H)
        h = jnp.tanh(xp + jnp.dot(h, w_hh,
                                  preferred_element_type=jnp.float32))

    # fc head on the last hidden state (kept in f32 for the tiny head).
    w_fc = fc_ref[0:hidden, :].astype(jnp.float32)                # (H, O)
    b_fc = fc_ref[hidden:hidden + 1, :].astype(jnp.float32)       # (1, O)
    logits = jnp.dot(h, w_fc, preferred_element_type=jnp.float32) + b_fc

    # numerically stable log_softmax along dim=1
    m = jnp.max(logits, axis=1, keepdims=True)
    shifted = logits - m
    lse = jnp.log(jnp.sum(jnp.exp(shifted), axis=1, keepdims=True))
    out_ref[...] = shifted - lse


def prepare_params(params, dtype=jnp.float32):
    """One-time repack of PyTorch-layout params into 2 right-multiply buffers.

    rnn_pack rows: [0:I_pad) = W_ih^T (zero-padded to a sublane multiple),
                   [I_pad:I_pad+H) = W_hh^T, [I_pad+H] = b_ih + b_hh.
    fc_pack rows:  [0:H) = W_fc^T, [H] = b_fc.
    Storing in bf16 halves DMA bytes; accumulation stays f32 in the kernel.
    """
    w_ih, w_hh, b_ih, b_hh, w_fc, b_fc = params
    H, I = w_ih.shape
    O = w_fc.shape[0]
    in_rows = _round_up(I, SUBLANE)
    w_ih_t = jnp.zeros((in_rows, H), jnp.float32).at[:I, :].set(w_ih.T)
    rnn_pack = jnp.concatenate(
        [w_ih_t, w_hh.T, (b_ih + b_hh).reshape(1, H)], axis=0).astype(dtype)
    fc_pack = jnp.concatenate(
        [w_fc.T, b_fc.reshape(1, O)], axis=0).astype(dtype)
    return rnn_pack, fc_pack


@partial(jax.jit, static_argnames=("batch_pad_multiple",))
def char_rnn_forward(x, prepared, *, batch_pad_multiple=None):
    """x: (S, B, I) float32. Returns (B, O) log-probs (float32).

    batch_pad_multiple: pad the batch dim toward this multiple (e.g. 128 on
    v5e, 256 on v6e/v7x) when batching many sequences per call; defaults to
    the minimum sublane group (8 for f32, 16 for bf16 activations).
    """
    rnn_pack, fc_pack = prepared
    H = rnn_pack.shape[1]
    in_rows = rnn_pack.shape[0] - H - 1
    O = fc_pack.shape[1]
    S, B, I = x.shape

    # Activations stored in the same dtype as the packed weights (bf16 halves
    # DMA bytes); all accumulation inside the kernel is f32.
    x = x.astype(rnn_pack.dtype)
    min_pad = 16 if rnn_pack.dtype == jnp.bfloat16 else SUBLANE
    pad_mult = max(batch_pad_multiple or 0, min_pad)
    Bp = _round_up(max(B, pad_mult), pad_mult)

    # Pad batch (rows) and feature (lanes, to the packed W_ih row count) with
    # zeros; padded rows/cols are inert and sliced away / multiply to zero.
    if Bp != B or in_rows != I:
        x = jnp.pad(x, ((0, 0), (0, Bp - B), (0, in_rows - I)))
    x2d = x.reshape(S * Bp, in_rows)   # time-major rows, metadata-only reshape

    vmem = pl.BlockSpec(memory_space=pltpu.MemorySpace.VMEM)
    out = pl.pallas_call(
        partial(char_rnn_kernel, seq_len=S, batch=Bp,
                in_rows=in_rows, hidden=H),
        out_shape=jax.ShapeDtypeStruct((Bp, O), jnp.float32),
        in_specs=[vmem, vmem, vmem],
        out_specs=vmem,
    )(x2d, rnn_pack, fc_pack)
    return out[:B]


def init_params(key, input_size, hidden_size, output_size):
    # Deterministic init mimicking PyTorch uniform(-1/sqrt(H), 1/sqrt(H)).
    k = jax.random.split(key, 6)
    s = 1.0 / jnp.sqrt(hidden_size)
    w_ih = jax.random.uniform(k[0], (hidden_size, input_size), jnp.float32, -s, s)
    w_hh = jax.random.uniform(k[1], (hidden_size, hidden_size), jnp.float32, -s, s)
    b_ih = jax.random.uniform(k[2], (hidden_size,), jnp.float32, -s, s)
    b_hh = jax.random.uniform(k[3], (hidden_size,), jnp.float32, -s, s)
    w_fc = jax.random.uniform(k[4], (output_size, hidden_size), jnp.float32, -s, s)
    b_fc = jax.random.uniform(k[5], (output_size,), jnp.float32, -s, s)
    return (w_ih, w_hh, b_ih, b_hh, w_fc, b_fc)


def reference_forward(x, params):
    # Pure-JAX reference of the PyTorch module forward (PyTorch weight layout).
    w_ih, w_hh, b_ih, b_hh, w_fc, b_fc = params
    S, B, I = x.shape
    H = w_hh.shape[0]
    h = jnp.zeros((B, H), jnp.float32)
    for t in range(S):
        h = jnp.tanh(x[t] @ w_ih.T + b_ih + h @ w_hh.T + b_hh)
    logits = h @ w_fc.T + b_fc
    return jax.nn.log_softmax(logits, axis=1)


if __name__ == "__main__":
    seq_len, batch, input_size, hidden_size, output_size = 8, 2, 8, 32, 8

    key = jax.random.PRNGKey(0)
    kx, kp = jax.random.split(key)
    x = jax.random.normal(kx, (seq_len, batch, input_size), jnp.float32)
    params = init_params(kp, input_size, hidden_size, output_size)
    ref = reference_forward(x, params)

    # f32 storage path -- strict check against the pure-JAX reference.
    prepared_f32 = prepare_params(params, dtype=jnp.float32)
    out_f32 = jax.block_until_ready(char_rnn_forward(x, prepared_f32))
    assert out_f32.shape == (batch, output_size)
    assert jnp.allclose(out_f32, ref, atol=1e-5, rtol=1e-5), "f32 mismatch vs reference"

    # bf16 weight/activation storage path (halved DMA bytes) -- relaxed check;
    # accumulation stays f32 inside the kernel.
    prepared_bf16 = prepare_params(params, dtype=jnp.bfloat16)
    out_bf16 = jax.block_until_ready(char_rnn_forward(x, prepared_bf16))
    assert out_bf16.shape == (batch, output_size)
    assert jnp.allclose(out_bf16, ref, atol=5e-2, rtol=5e-2), "bf16 mismatch vs reference"

    print("KERNEL_OK")
</pallas_src>

<mosaic_0001>
module attributes {stable_mosaic.version = 11 : i64} {
  func.func @char_rnn_kernel(%arg0: memref<64x8xf32, #tpu.memory_space<vmem>>, %arg1: memref<41x32xf32, #tpu.memory_space<vmem>>, %arg2: memref<33x8xf32, #tpu.memory_space<vmem>>, %arg3: memref<8x8xf32, #tpu.memory_space<vmem>>) attributes {dimension_semantics = [], scalar_prefetch = 0 : i64, scratch_operands = 0 : i64, tpu.core_type = #tpu.core_type<tc>} {
    %c0 = arith.constant 0 : index
    %c0_0 = arith.constant 0 : index
    %0 = vector.load %arg1[%c0, %c0_0] : memref<41x32xf32, #tpu.memory_space<vmem>>, vector<8x32xf32>
    %c40 = arith.constant 40 : index
    %c0_1 = arith.constant 0 : index
    %1 = vector.load %arg1[%c40, %c0_1] : memref<41x32xf32, #tpu.memory_space<vmem>>, vector<1x32xf32>
    %c0_2 = arith.constant 0 : index
    %c0_3 = arith.constant 0 : index
    %2 = vector.load %arg0[%c0_2, %c0_3] : memref<64x8xf32, #tpu.memory_space<vmem>>, vector<64x8xf32>
    %cst = arith.constant dense<0.000000e+00> : vector<64x32xf32>
    %3 = tpu.matmul %2, %0, %cst {dimension_numbers = #tpu.dot_dimension_numbers<[1], [0], [0], [1], [0, 0, 1, 1], [], []>} : vector<64x8xf32>, vector<8x32xf32>, vector<64x32xf32> -> vector<64x32xf32>
    %4 = vector.broadcast %1 : vector<1x32xf32> to vector<64x32xf32>
    %5 = arith.addf %3, %4 : vector<64x32xf32>
    %c8 = arith.constant 8 : index
    %c0_4 = arith.constant 0 : index
    %6 = vector.load %arg1[%c8, %c0_4] : memref<41x32xf32, #tpu.memory_space<vmem>>, vector<32x32xf32>
    %cst_5 = arith.constant 0.000000e+00 : f32
    %7 = vector.broadcast %cst_5 : f32 to vector<8x32xf32>
    %8 = vector.extract_strided_slice %5 {offsets = [0, 0], sizes = [8, 32], strides = [1, 1]} : vector<64x32xf32> to vector<8x32xf32>
    %cst_6 = arith.constant dense<0.000000e+00> : vector<8x32xf32>
    %9 = tpu.matmul %7, %6, %cst_6 {dimension_numbers = #tpu.dot_dimension_numbers<[1], [0], [0], [1], [0, 0, 1, 1], [], []>} : vector<8x32xf32>, vector<32x32xf32>, vector<8x32xf32> -> vector<8x32xf32>
    %10 = arith.addf %8, %9 : vector<8x32xf32>
    %11 = math.tanh %10 : vector<8x32xf32>
    %12 = vector.extract_strided_slice %5 {offsets = [8, 0], sizes = [8, 32], strides = [1, 1]} : vector<64x32xf32> to vector<8x32xf32>
    %cst_7 = arith.constant dense<0.000000e+00> : vector<8x32xf32>
    %13 = tpu.matmul %11, %6, %cst_7 {dimension_numbers = #tpu.dot_dimension_numbers<[1], [0], [0], [1], [0, 0, 1, 1], [], []>} : vector<8x32xf32>, vector<32x32xf32>, vector<8x32xf32> -> vector<8x32xf32>
    %14 = arith.addf %12, %13 : vector<8x32xf32>
    %15 = math.tanh %14 : vector<8x32xf32>
    %16 = vector.extract_strided_slice %5 {offsets = [16, 0], sizes = [8, 32], strides = [1, 1]} : vector<64x32xf32> to vector<8x32xf32>
    %cst_8 = arith.constant dense<0.000000e+00> : vector<8x32xf32>
    %17 = tpu.matmul %15, %6, %cst_8 {dimension_numbers = #tpu.dot_dimension_numbers<[1], [0], [0], [1], [0, 0, 1, 1], [], []>} : vector<8x32xf32>, vector<32x32xf32>, vector<8x32xf32> -> vector<8x32xf32>
    %18 = arith.addf %16, %17 : vector<8x32xf32>
    %19 = math.tanh %18 : vector<8x32xf32>
    %20 = vector.extract_strided_slice %5 {offsets = [24, 0], sizes = [8, 32], strides = [1, 1]} : vector<64x32xf32> to vector<8x32xf32>
    %cst_9 = arith.constant dense<0.000000e+00> : vector<8x32xf32>
    %21 = tpu.matmul %19, %6, %cst_9 {dimension_numbers = #tpu.dot_dimension_numbers<[1], [0], [0], [1], [0, 0, 1, 1], [], []>} : vector<8x32xf32>, vector<32x32xf32>, vector<8x32xf32> -> vector<8x32xf32>
    %22 = arith.addf %20, %21 : vector<8x32xf32>
    %23 = math.tanh %22 : vector<8x32xf32>
    %24 = vector.extract_strided_slice %5 {offsets = [32, 0], sizes = [8, 32], strides = [1, 1]} : vector<64x32xf32> to vector<8x32xf32>
    %cst_10 = arith.constant dense<0.000000e+00> : vector<8x32xf32>
    %25 = tpu.matmul %23, %6, %cst_10 {dimension_numbers = #tpu.dot_dimension_numbers<[1], [0], [0], [1], [0, 0, 1, 1], [], []>} : vector<8x32xf32>, vector<32x32xf32>, vector<8x32xf32> -> vector<8x32xf32>
    %26 = arith.addf %24, %25 : vector<8x32xf32>
    %27 = math.tanh %26 : vector<8x32xf32>
    %28 = vector.extract_strided_slice %5 {offsets = [40, 0], sizes = [8, 32], strides = [1, 1]} : vector<64x32xf32> to vector<8x32xf32>
    %cst_11 = arith.constant dense<0.000000e+00> : vector<8x32xf32>
    %29 = tpu.matmul %27, %6, %cst_11 {dimension_numbers = #tpu.dot_dimension_numbers<[1], [0], [0], [1], [0, 0, 1, 1], [], []>} : vector<8x32xf32>, vector<32x32xf32>, vector<8x32xf32> -> vector<8x32xf32>
    %30 = arith.addf %28, %29 : vector<8x32xf32>
    %31 = math.tanh %30 : vector<8x32xf32>
    %32 = vector.extract_strided_slice %5 {offsets = [48, 0], sizes = [8, 32], strides = [1, 1]} : vector<64x32xf32> to vector<8x32xf32>
    %cst_12 = arith.constant dense<0.000000e+00> : vector<8x32xf32>
    %33 = tpu.matmul %31, %6, %cst_12 {dimension_numbers = #tpu.dot_dimension_numbers<[1], [0], [0], [1], [0, 0, 1, 1], [], []>} : vector<8x32xf32>, vector<32x32xf32>, vector<8x32xf32> -> vector<8x32xf32>
    %34 = arith.addf %32, %33 : vector<8x32xf32>
    %35 = math.tanh %34 : vector<8x32xf32>
    %36 = vector.extract_strided_slice %5 {offsets = [56, 0], sizes = [8, 32], strides = [1, 1]} : vector<64x32xf32> to vector<8x32xf32>
    %cst_13 = arith.constant dense<0.000000e+00> : vector<8x32xf32>
    %37 = tpu.matmul %35, %6, %cst_13 {dimension_numbers = #tpu.dot_dimension_numbers<[1], [0], [0], [1], [0, 0, 1, 1], [], []>} : vector<8x32xf32>, vector<32x32xf32>, vector<8x32xf32> -> vector<8x32xf32>
    %38 = arith.addf %36, %37 : vector<8x32xf32>
    %39 = math.tanh %38 : vector<8x32xf32>
    %c0_14 = arith.constant 0 : index
    %c0_15 = arith.constant 0 : index
    %40 = vector.load %arg2[%c0_14, %c0_15] : memref<33x8xf32, #tpu.memory_space<vmem>>, vector<32x8xf32>
    %c32 = arith.constant 32 : index
    %c0_16 = arith.constant 0 : index
    %41 = vector.load %arg2[%c32, %c0_16] : memref<33x8xf32, #tpu.memory_space<vmem>>, vector<1x8xf32>
    %cst_17 = arith.constant dense<0.000000e+00> : vector<8x8xf32>
    %42 = tpu.matmul %39, %40, %cst_17 {dimension_numbers = #tpu.dot_dimension_numbers<[1], [0], [0], [1], [0, 0, 1, 1], [], []>} : vector<8x32xf32>, vector<32x8xf32>, vector<8x8xf32> -> vector<8x8xf32>
    %43 = vector.broadcast %41 : vector<1x8xf32> to vector<8x8xf32>
    %44 = arith.addf %42, %43 : vector<8x8xf32>
    %cst_18 = arith.constant dense<0xFF800000> : vector<8xf32>
    %45 = vector.multi_reduction <maximumf>, %44, %cst_18 [1] : vector<8x8xf32> to vector<8xf32>
    %46 = vector.shape_cast %45 : vector<8xf32> to vector<8x1xf32>
    %47 = vector.broadcast %46 : vector<8x1xf32> to vector<8x8xf32>
    %48 = arith.subf %44, %47 : vector<8x8xf32>
    %49 = math.exp %48 : vector<8x8xf32>
    %cst_19 = arith.constant dense<0.000000e+00> : vector<8xf32>
    %50 = vector.multi_reduction <add>, %49, %cst_19 [1] : vector<8x8xf32> to vector<8xf32>
    %51 = vector.shape_cast %50 : vector<8xf32> to vector<8x1xf32>
    %52 = math.log %51 : vector<8x1xf32>
    %53 = vector.broadcast %52 : vector<8x1xf32> to vector<8x8xf32>
    %54 = arith.subf %48, %53 : vector<8x8xf32>
    %c0_20 = arith.constant 0 : index
    %c0_21 = arith.constant 0 : index
    %55 = vector.load %arg3[%c0_20, %c0_21] : memref<8x8xf32, #tpu.memory_space<vmem>>, vector<8x8xf32>
    tpu.vector_store %arg3[%c0_20, %c0_21], %54 {strides = array<i32>} : memref<8x8xf32, #tpu.memory_space<vmem>>, vector<8x8xf32>,
    return
  }
}

</mosaic_0001>

<llo_original>
// kernel: char_rnn_forward.1
$region0: #{char_rnn_forward.1}
  #allocation0 [shape = 'u32[]', space=smem, size = 0x4, offset = 0x4, fixed_abs, tag = 'smem constant byte address 0x4 - core index']
  #allocation1 [shape = 'u32[144,128]{1,0:T(1,128)}', space=vmem, size = 0x12000, scoped, tag = 'internal scratch']
  %s0 = inlined_call_operand.vmem [shape: f32[64,8], index: 0, kind: input, shape index: {}]
  %s1 = inlined_call_operand.vmem [shape: f32[41,32], index: 1, kind: input, shape index: {}]
  %s2 = inlined_call_operand.vmem [shape: f32[33,8], index: 2, kind: input, shape index: {}]
  %s3 = inlined_call_operand.vmem [shape: f32[8,8], index: 3, kind: output, shape index: {}]
  %s4 = sld [smem:[#allocation0]]
  $region22: #{char_rnn_forward.1} parent=0
    _
  %s6 = ssub.s32 1, %s4
  %s7 = scalar_select 0, %s6, %s4
  // Predicated region
  $region2: #{char_rnn_forward.1} parent=0 // pred_check
    _
  $region3: #{char_rnn_forward.1} parent=0 // pred_check_branch
    %9 = sbr.rel (0) target = $region5
  $region4: #{char_rnn_forward.1} parent=0 // pred_region
    _
  $region5: #{char_rnn_forward.1} parent=0 // pred_fallthru
    _
  // Predicated region
  $region6: #{char_rnn_forward.1} parent=0 // pred_check
    _
  $region7: #{char_rnn_forward.1} parent=0 // pred_check_branch
    %11 = sbr.rel (0) target = $region9
  $region8: #{char_rnn_forward.1} parent=0 // pred_region
    _
  $region9: #{char_rnn_forward.1} parent=0 // pred_fallthru
    _
  // Predicated region
  $region10: #{char_rnn_forward.1} parent=0 // pred_check
    _
  $region11: #{char_rnn_forward.1} parent=0 // pred_check_branch
    %13 = sbr.rel (0) target = $region13
  $region12: #{char_rnn_forward.1} parent=0 // pred_region
    _
  $region13: #{char_rnn_forward.1} parent=0 // pred_fallthru
    _
  %v14 = vld [vmem:[%s1] sm:$0xff]
  %v15 = vld [vmem:[%s1 + $0x28] sm:$0x1]
  %v16 = vld [vmem:[%s0] sm:$0xff]
  %v17 = vld [vmem:[%s0 + $0x8] sm:$0xff]
  %v18 = vld [vmem:[%s0 + $0x10] sm:$0xff]
  %v19 = vld [vmem:[%s0 + $0x18] sm:$0xff]
  %v20 = vld [vmem:[%s0 + $0x20] sm:$0xff]
  %v21 = vld [vmem:[%s0 + $0x28] sm:$0xff]
  %v22 = vld [vmem:[%s0 + $0x30] sm:$0xff]
  %v23 = vld [vmem:[%s0 + $0x38] sm:$0xff]
  %v24 = vlaneseq
  %v25 = vshrl.u32 %v24, 7
  %v26 = vsub.s32 0, %v25
  %v27 = vrot.slane %v15, %v26
  %vm28 = vcmask 64512
  %v30 = vsel %vm28, %v16, 0
  %v33 = vsel %vm28, %v17, 0
  %v36 = vsel %vm28, %v18, 0
  %v39 = vsel %vm28, %v19, 0
  %v42 = vsel %vm28, %v20, 0
  %v45 = vsel %vm28, %v21, 0
  %v48 = vsel %vm28, %v22, 0
  %v51 = vsel %vm28, %v23, 0
  %53 = vmatprep.subr.mxu0 0.0
  %54 = vmatpush1.msra.mxu0 0.0
  %55 = vmatprep.subr.mxu0 0.0
  %56 = vmatpush1.msra.mxu0 0.0
  %57 = vmatprep.subr.mxu0 0.0
  %58 = vmatpush1.msra.mxu0 0.0
  %59 = vmatprep.subr.mxu0 0.0
  %60 = vmatpush1.msra.mxu0 0.0
  %61 = vmatprep.subr.mxu0 0.0
  %62 = vmatpush1.msra.mxu0 0.0
  %63 = vmatprep.subr.mxu0 0.0
  %64 = vmatpush1.msra.mxu0 0.0
  %65 = vmatprep.subr.mxu0 0.0
  %66 = vmatpush1.msra.mxu0 0.0
  %67 = vmatprep.subr.mxu0 0.0
  %68 = vmatpush1.msra.mxu0 0.0
  %69 = vmatprep.subr.mxu0 0.0
  %70 = vmatpush1.msra.mxu0 0.0
  %71 = vmatprep.subr.mxu0 0.0
  %72 = vmatpush1.msra.mxu0 0.0
  %73 = vmatprep.subr.mxu0 0.0
  %74 = vmatpush1.msra.mxu0 0.0
  %75 = vmatprep.subr.mxu0 0.0
  %76 = vmatpush1.msra.mxu0 0.0
  %77 = vmatprep.subr.mxu0 0.0
  %78 = vmatpush1.msra.mxu0 0.0
  %79 = vmatprep.subr.mxu0 0.0
  %80 = vmatpush1.msra.mxu0 0.0
  %81 = vmatprep.subr.mxu0 0.0
  %82 = vmatpush1.msra.mxu0 0.0
  %83 = vmatprep.subr.mxu0 0.0
  %84 = vmatpush1.msra.mxu0 %v14
  %85 = vmatprep.subr.mxu0 0.0
  %86 = vmatpush2.msra.mxu0 0.0
  %87 = vmatprep.subr.mxu0 0.0
  %88 = vmatpush2.msra.mxu0 0.0
  %89 = vmatprep.subr.mxu0 0.0
  %90 = vmatpush2.msra.mxu0 0.0
  %91 = vmatprep.subr.mxu0 0.0
  %92 = vmatpush2.msra.mxu0 0.0
  %93 = vmatprep.subr.mxu0 0.0
  %94 = vmatpush2.msra.mxu0 0.0
  %95 = vmatprep.subr.mxu0 0.0
  %96 = vmatpush2.msra.mxu0 0.0
  %97 = vmatprep.subr.mxu0 0.0
  %98 = vmatpush2.msra.mxu0 0.0
  %99 = vmatprep.subr.mxu0 0.0
  %100 = vmatpush2.msra.mxu0 0.0
  %101 = vmatprep.subr.mxu0 0.0
  %102 = vmatpush2.msra.mxu0 0.0
  %103 = vmatprep.subr.mxu0 0.0
  %104 = vmatpush2.msra.mxu0 0.0
  %105 = vmatprep.subr.mxu0 0.0
  %106 = vmatpush2.msra.mxu0 0.0
  %107 = vmatprep.subr.mxu0 0.0
  %108 = vmatpush2.msra.mxu0 0.0
  %109 = vmatprep.subr.mxu0 0.0
  %110 = vmatpush2.msra.mxu0 0.0
  %111 = vmatprep.subr.mxu0 0.0
  %112 = vmatpush2.msra.mxu0 0.0
  %113 = vmatprep.subr.mxu0 0.0
  %114 = vmatpush2.msra.mxu0 0.0
  %115 = vmatprep.subr.mxu0 0.0
  %116 = vmatpush2.msra.mxu0 0.0
  %117 = vmatprep.mubr.f32.mxu0 0.0
  %118 = vmatmul.mubr.f32.gmra.mxu0 %v30
  %v119 = vpop.f32.mrf.mxu0
  %v120 = vadd.f32 %v27, %v119
  %v121 = vpop.f32.mrf.mxu0
  %122 = vmatprep.mubr.f32.mxu0 0.0
  %123 = vmatmul.mubr.f32.gmra.mxu0 %v33
  %v124 = vpop.f32.mrf.mxu0
  %v125 = vadd.f32 %v27, %v124
  %v126 = vpop.f32.mrf.mxu0
  %127 = vmatprep.mubr.f32.mxu0 0.0
  %128 = vmatmul.mubr.f32.gmra.mxu0 %v36
  %v129 = vpop.f32.mrf.mxu0
  %v130 = vadd.f32 %v27, %v129
  %v131 = vpop.f32.mrf.mxu0
  %132 = vmatprep.mubr.f32.mxu0 0.0
  %133 = vmatmul.mubr.f32.gmra.mxu0 %v39
  %v134 = vpop.f32.mrf.mxu0
  %v135 = vadd.f32 %v27, %v134
  %v136 = vpop.f32.mrf.mxu0
  %137 = vmatprep.mubr.f32.mxu0 0.0
  %138 = vmatmul.mubr.f32.gmra.mxu0 %v42
  %v139 = vpop.f32.mrf.mxu0
  %v140 = vadd.f32 %v27, %v139
  %v141 = vpop.f32.mrf.mxu0
  %142 = vmatprep.mubr.f32.mxu0 0.0
  %143 = vmatmul.mubr.f32.gmra.mxu0 %v45
  %v144 = vpop.f32.mrf.mxu0
  %v145 = vadd.f32 %v27, %v144
  %v146 = vpop.f32.mrf.mxu0
  %147 = vmatprep.mubr.f32.mxu0 0.0
  %148 = vmatmul.mubr.f32.gmra.mxu0 %v48
  %v149 = vpop.f32.mrf.mxu0
  %v150 = vadd.f32 %v27, %v149
  %v151 = vpop.f32.mrf.mxu0
  %152 = vmatprep.mubr.f32.mxu0 0.0
  %153 = vmatmul.mubr.f32.gmra.mxu0 %v51
  %v154 = vpop.f32.mrf.mxu0
  %v155 = vadd.f32 %v27, %v154
  %v156 = vpop.f32.mrf.mxu0
  %157 = vdwg.mxu0
  %v158 = vld [vmem:[%s1 + $0x8] sm:$0xff]
  %v159 = vld [vmem:[%s1 + $0x10] sm:$0xff]
  %v160 = vld [vmem:[%s1 + $0x18] sm:$0xff]
  %v161 = vld [vmem:[%s1 + $0x20] sm:$0xff]
  %vm162 = vcmask 261120
  %v164 = vsel %vm162, 0.0, 0
  %166 = vmatprep.subr.mxu0 0.0
  %167 = vmatpush1.msra.mxu0 0.0
  %168 = vmatprep.subr.mxu0 0.0
  %169 = vmatpush1.msra.mxu0 0.0
  %170 = vmatprep.subr.mxu0 0.0
  %171 = vmatpush1.msra.mxu0 0.0
  %172 = vmatprep.subr.mxu0 0.0
  %173 = vmatpush1.msra.mxu0 0.0
  %174 = vmatprep.subr.mxu0 0.0
  %175 = vmatpush1.msra.mxu0 0.0
  %176 = vmatprep.subr.mxu0 0.0
  %177 = vmatpush1.msra.mxu0 0.0
  %178 = vmatprep.subr.mxu0 0.0
  %179 = vmatpush1.msra.mxu0 0.0
  %180 = vmatprep.subr.mxu0 0.0
  %181 = vmatpush1.msra.mxu0 0.0
  %182 = vmatprep.subr.mxu0 0.0
  %183 = vmatpush1.msra.mxu0 0.0
  %184 = vmatprep.subr.mxu0 0.0
  %185 = vmatpush1.msra.mxu0 0.0
  %186 = vmatprep.subr.mxu0 0.0
  %187 = vmatpush1.msra.mxu0 0.0
  %188 = vmatprep.subr.mxu0 0.0
  %189 = vmatpush1.msra.mxu0 0.0
  %190 = vmatprep.subr.mxu0 0.0
  %191 = vmatpush1.msra.mxu0 %v161
  %192 = vmatprep.subr.mxu0 0.0
  %193 = vmatpush1.msra.mxu0 %v160
  %194 = vmatprep.subr.mxu0 0.0
  %195 = vmatpush1.msra.mxu0 %v159
  %196 = vmatprep.subr.mxu0 0.0
  %197 = vmatpush1.msra.mxu0 %v158
  %198 = vmatprep.subr.mxu0 0.0
  %199 = vmatpush2.msra.mxu0 0.0
  %200 = vmatprep.subr.mxu0 0.0
  %201 = vmatpush2.msra.mxu0 0.0
  %202 = vmatprep.subr.mxu0 0.0
  %203 = vmatpush2.msra.mxu0 0.0
  %204 = vmatprep.subr.mxu0 0.0
  %205 = vmatpush2.msra.mxu0 0.0
  %206 = vmatprep.subr.mxu0 0.0
  %207 = vmatpush2.msra.mxu0 0.0
  %208 = vmatprep.subr.mxu0 0.0
  %209 = vmatpush2.msra.mxu0 0.0
  %210 = vmatprep.subr.mxu0 0.0
  %211 = vmatpush2.msra.mxu0 0.0
  %212 = vmatprep.subr.mxu0 0.0
  %213 = vmatpush2.msra.mxu0 0.0
  %214 = vmatprep.subr.mxu0 0.0
  %215 = vmatpush2.msra.mxu0 0.0
  %216 = vmatprep.subr.mxu0 0.0
  %217 = vmatpush2.msra.mxu0 0.0
  %218 = vmatprep.subr.mxu0 0.0
  %219 = vmatpush2.msra.mxu0 0.0
  %220 = vmatprep.subr.mxu0 0.0
  %221 = vmatpush2.msra.mxu0 0.0
  %222 = vmatprep.subr.mxu0 0.0
  %223 = vmatpush2.msra.mxu0 0.0
  %224 = vmatprep.subr.mxu0 0.0
  %225 = vmatpush2.msra.mxu0 0.0
  %226 = vmatprep.subr.mxu0 0.0
  %227 = vmatpush2.msra.mxu0 0.0
  %228 = vmatprep.subr.mxu0 0.0
  %229 = vmatpush2.msra.mxu0 0.0
  %230 = vmatprep.mubr.f32.mxu0 0.0
  %231 = vmatmul.mubr.f32.gmra.mxu0 %v164
  %v232 = vpop.f32.mrf.mxu0
  %v233 = vadd.f32 0.0, %v232
  %v234 = vpop.f32.mrf.mxu0
  %235 = vdwg.mxu0
  %v236 = vadd.f32 %v120, %v233
  %v237 = vtanh.pop %v236
  %v239 = vsel %vm162, %v237, 0
  %241 = vmatprep.subr.mxu0 0.0
  %242 = vmatpush1.msra.mxu0 0.0
  %243 = vmatprep.subr.mxu0 0.0
  %244 = vmatpush1.msra.mxu0 0.0
  %245 = vmatprep.subr.mxu0 0.0
  %246 = vmatpush1.msra.mxu0 0.0
  %247 = vmatprep.subr.mxu0 0.0
  %248 = vmatpush1.msra.mxu0 0.0
  %249 = vmatprep.subr.mxu0 0.0
  %250 = vmatpush1.msra.mxu0 0.0
  %251 = vmatprep.subr.mxu0 0.0
  %252 = vmatpush1.msra.mxu0 0.0
  %253 = vmatprep.subr.mxu0 0.0
  %254 = vmatpush1.msra.mxu0 0.0
  %255 = vmatprep.subr.mxu0 0.0
  %256 = vmatpush1.msra.mxu0 0.0
  %257 = vmatprep.subr.mxu0 0.0
  %258 = vmatpush1.msra.mxu0 0.0
  %259 = vmatprep.subr.mxu0 0.0
  %260 = vmatpush1.msra.mxu0 0.0
  %261 = vmatprep.subr.mxu0 0.0
  %262 = vmatpush1.msra.mxu0 0.0
  %263 = vmatprep.subr.mxu0 0.0
  %264 = vmatpush1.msra.mxu0 0.0
  %265 = vmatprep.subr.mxu0 0.0
  %266 = vmatpush1.msra.mxu0 %v161
  %267 = vmatprep.subr.mxu0 0.0
  %268 = vmatpush1.msra.mxu0 %v160
  %269 = vmatprep.subr.mxu0 0.0
  %270 = vmatpush1.msra.mxu0 %v159
  %271 = vmatprep.subr.mxu0 0.0
  %272 = vmatpush1.msra.mxu0 %v158
  %273 = vmatprep.subr.mxu0 0.0
  %274 = vmatpush2.msra.mxu0 0.0
  %275 = vmatprep.subr.mxu0 0.0
  %276 = vmatpush2.msra.mxu0 0.0
  %277 = vmatprep.subr.mxu0 0.0
  %278 = vmatpush2.msra.mxu0 0.0
  %279 = vmatprep.subr.mxu0 0.0
  %280 = vmatpush2.msra.mxu0 0.0
  %281 = vmatprep.subr.mxu0 0.0
  %282 = vmatpush2.msra.mxu0 0.0
  %283 = vmatprep.subr.mxu0 0.0
  %284 = vmatpush2.msra.mxu0 0.0
  %285 = vmatprep.subr.mxu0 0.0
  %286 = vmatpush2.msra.mxu0 0.0
  %287 = vmatprep.subr.mxu0 0.0
  %288 = vmatpush2.msra.mxu0 0.0
  %289 = vmatprep.subr.mxu0 0.0
  %290 = vmatpush2.msra.mxu0 0.0
  %291 = vmatprep.subr.mxu0 0.0
  %292 = vmatpush2.msra.mxu0 0.0
  %293 = vmatprep.subr.mxu0 0.0
  %294 = vmatpush2.msra.mxu0 0.0
  %295 = vmatprep.subr.mxu0 0.0
  %296 = vmatpush2.msra.mxu0 0.0
  %297 = vmatprep.subr.mxu0 0.0
  %298 = vmatpush2.msra.mxu0 0.0
  %299 = vmatprep.subr.mxu0 0.0
  %300 = vmatpush2.msra.mxu0 0.0
  %301 = vmatprep.subr.mxu0 0.0
  %302 = vmatpush2.msra.mxu0 0.0
  %303 = vmatprep.subr.mxu0 0.0
  %304 = vmatpush2.msra.mxu0 0.0
  %305 = vmatprep.mubr.f32.mxu0 0.0
  %306 = vmatmul.mubr.f32.gmra.mxu0 %v239
  %v307 = vpop.f32.mrf.mxu0
  %v308 = vadd.f32 0.0, %v307
  %v309 = vpop.f32.mrf.mxu0
  %310 = vdwg.mxu0
  %v311 = vadd.f32 %v125, %v308
  %v312 = vtanh.pop %v311
  %v314 = vsel %vm162, %v312, 0
  %316 = vmatprep.subr.mxu0 0.0
  %317 = vmatpush1.msra.mxu0 0.0
  %318 = vmatprep.subr.mxu0 0.0
  %319 = vmatpush1.msra.mxu0 0.0
  %320 = vmatprep.subr.mxu0 0.0
  %321 = vmatpush1.msra.mxu0 0.0
  %322 = vmatprep.subr.mxu0 0.0
  %323 = vmatpush1.msra.mxu0 0.0
  %324 = vmatprep.subr.mxu0 0.0
  %325 = vmatpush1.msra.mxu0 0.0
  %326 = vmatprep.subr.mxu0 0.0
  %327 = vmatpush1.msra.mxu0 0.0
  %328 = vmatprep.subr.mxu0 0.0
  %329 = vmatpush1.msra.mxu0 0.0
  %330 = vmatprep.subr.mxu0 0.0
  %331 = vmatpush1.msra.mxu0 0.0
  %332 = vmatprep.subr.mxu0 0.0
  %333 = vmatpush1.msra.mxu0 0.0
  %334 = vmatprep.subr.mxu0 0.0
  %335 = vmatpush1.msra.mxu0 0.0
  %336 = vmatprep.subr.mxu0 0.0
  %337 = vmatpush1.msra.mxu0 0.0
  %338 = vmatprep.subr.mxu0 0.0
  %339 = vmatpush1.msra.mxu0 0.0
  %340 = vmatprep.subr.mxu0 0.0
  %341 = vmatpush1.msra.mxu0 %v161
  %342 = vmatprep.subr.mxu0 0.0
  %343 = vmatpush1.msra.mxu0 %v160
  %344 = vmatprep.subr.mxu0 0.0
  %345 = vmatpush1.msra.mxu0 %v159
  %346 = vmatprep.subr.mxu0 0.0
  %347 = vmatpush1.msra.mxu0 %v158
  %348 = vmatprep.subr.mxu0 0.0
  %349 = vmatpush2.msra.mxu0 0.0
  %350 = vmatprep.subr.mxu0 0.0
  %351 = vmatpush2.msra.mxu0 0.0
  %352 = vmatprep.subr.mxu0 0.0
  %353 = vmatpush2.msra.mxu0 0.0
  %354 = vmatprep.subr.mxu0 0.0
  %355 = vmatpush2.msra.mxu0 0.0
  %356 = vmatprep.subr.mxu0 0.0
  %357 = vmatpush2.msra.mxu0 0.0
  %358 = vmatprep.subr.mxu0 0.0
  %359 = vmatpush2.msra.mxu0 0.0
  %360 = vmatprep.subr.mxu0 0.0
  %361 = vmatpush2.msra.mxu0 0.0
  %362 = vmatprep.subr.mxu0 0.0
  %363 = vmatpush2.msra.mxu0 0.0
  %364 = vmatprep.subr.mxu0 0.0
  %365 = vmatpush2.msra.mxu0 0.0
  %366 = vmatprep.subr.mxu0 0.0
  %367 = vmatpush2.msra.mxu0 0.0
  %368 = vmatprep.subr.mxu0 0.0
  %369 = vmatpush2.msra.mxu0 0.0
  %370 = vmatprep.subr.mxu0 0.0
  %371 = vmatpush2.msra.mxu0 0.0
  %372 = vmatprep.subr.mxu0 0.0
  %373 = vmatpush2.msra.mxu0 0.0
  %374 = vmatprep.subr.mxu0 0.0
  %375 = vmatpush2.msra.mxu0 0.0
  %376 = vmatprep.subr.mxu0 0.0
  %377 = vmatpush2.msra.mxu0 0.0
  %378 = vmatprep.subr.mxu0 0.0
  %379 = vmatpush2.msra.mxu0 0.0
  %380 = vmatprep.mubr.f32.mxu0 0.0
  %381 = vmatmul.mubr.f32.gmra.mxu0 %v314
  %v382 = vpop.f32.mrf.mxu0
  %v383 = vadd.f32 0.0, %v382
  %v384 = vpop.f32.mrf.mxu0
  %385 = vdwg.mxu0
  %v386 = vadd.f32 %v130, %v383
  %v387 = vtanh.pop %v386
  %v389 = vsel %vm162, %v387, 0
  %391 = vmatprep.subr.mxu0 0.0
  %392 = vmatpush1.msra.mxu0 0.0
  %393 = vmatprep.subr.mxu0 0.0
  %394 = vmatpush1.msra.mxu0 0.0
  %395 = vmatprep.subr.mxu0 0.0
  %396 = vmatpush1.msra.mxu0 0.0
  %397 = vmatprep.subr.mxu0 0.0
  %398 = vmatpush1.msra.mxu0 0.0
  %399 = vmatprep.subr.mxu0 0.0
  %400 = vmatpush1.msra.mxu0 0.0
  %401 = vmatprep.subr.mxu0 0.0
  %402 = vmatpush1.msra.mxu0 0.0
  %403 = vmatprep.subr.mxu0 0.0
  %404 = vmatpush1.msra.mxu0 0.0
  %405 = vmatprep.subr.mxu0 0.0
  %406 = vmatpush1.msra.mxu0 0.0
  %407 = vmatprep.subr.mxu0 0.0
  %408 = vmatpush1.msra.mxu0 0.0
  %409 = vmatprep.subr.mxu0 0.0
  %410 = vmatpush1.msra.mxu0 0.0
  %411 = vmatprep.subr.mxu0 0.0
  %412 = vmatpush1.msra.mxu0 0.0
  %413 = vmatprep.subr.mxu0 0.0
  %414 = vmatpush1.msra.mxu0 0.0
  %415 = vmatprep.subr.mxu0 0.0
  %416 = vmatpush1.msra.mxu0 %v161
  %417 = vmatprep.subr.mxu0 0.0
  %418 = vmatpush1.msra.mxu0 %v160
  %419 = vmatprep.subr.mxu0 0.0
  %420 = vmatpush1.msra.mxu0 %v159
  %421 = vmatprep.subr.mxu0 0.0
  %422 = vmatpush1.msra.mxu0 %v158
  %423 = vmatprep.subr.mxu0 0.0
  %424 = vmatpush2.msra.mxu0 0.0
  %425 = vmatprep.subr.mxu0 0.0
  %426 = vmatpush2.msra.mxu0 0.0
  %427 = vmatprep.subr.mxu0 0.0
  %428 = vmatpush2.msra.mxu0 0.0
  %429 = vmatprep.subr.mxu0 0.0
  %430 = vmatpush2.msra.mxu0 0.0
  %431 = vmatprep.subr.mxu0 0.0
  %432 = vmatpush2.msra.mxu0 0.0
  %433 = vmatprep.subr.mxu0 0.0
  %434 = vmatpush2.msra.mxu0 0.0
  %435 = vmatprep.subr.mxu0 0.0
  %436 = vmatpush2.msra.mxu0 0.0
  %437 = vmatprep.subr.mxu0 0.0
  %438 = vmatpush2.msra.mxu0 0.0
  %439 = vmatprep.subr.mxu0 0.0
  %440 = vmatpush2.msra.mxu0 0.0
  %441 = vmatprep.subr.mxu0 0.0
  %442 = vmatpush2.msra.mxu0 0.0
  %443 = vmatprep.subr.mxu0 0.0
  %444 = vmatpush2.msra.mxu0 0.0
  %445 = vmatprep.subr.mxu0 0.0
  %446 = vmatpush2.msra.mxu0 0.0
  %447 = vmatprep.subr.mxu0 0.0
  %448 = vmatpush2.msra.mxu0 0.0
  %449 = vmatprep.subr.mxu0 0.0
  %450 = vmatpush2.msra.mxu0 0.0
  %451 = vmatprep.subr.mxu0 0.0
  %452 = vmatpush2.msra.mxu0 0.0
  %453 = vmatprep.subr.mxu0 0.0
  %454 = vmatpush2.msra.mxu0 0.0
  %455 = vmatprep.mubr.f32.mxu0 0.0
  %456 = vmatmul.mubr.f32.gmra.mxu0 %v389
  %v457 = vpop.f32.mrf.mxu0
  %v458 = vadd.f32 0.0, %v457
  %v459 = vpop.f32.mrf.mxu0
  %460 = vdwg.mxu0
  %v461 = vadd.f32 %v135, %v458
  %v462 = vtanh.pop %v461
  %v464 = vsel %vm162, %v462, 0
  %466 = vmatprep.subr.mxu0 0.0
  %467 = vmatpush1.msra.mxu0 0.0
  %468 = vmatprep.subr.mxu0 0.0
  %469 = vmatpush1.msra.mxu0 0.0
  %470 = vmatprep.subr.mxu0 0.0
  %471 = vmatpush1.msra.mxu0 0.0
  %472 = vmatprep.subr.mxu0 0.0
  %473 = vmatpush1.msra.mxu0 0.0
  %474 = vmatprep.subr.mxu0 0.0
  %475 = vmatpush1.msra.mxu0 0.0
  %476 = vmatprep.subr.mxu0 0.0
  %477 = vmatpush1.msra.mxu0 0.0
  %478 = vmatprep.subr.mxu0 0.0
  %479 = vmatpush1.msra.mxu0 0.0
  %480 = vmatprep.subr.mxu0 0.0
  %481 = vmatpush1.msra.mxu0 0.0
  %482 = vmatprep.subr.mxu0 0.0
  %483 = vmatpush1.msra.mxu0 0.0
  %484 = vmatprep.subr.mxu0 0.0
  %485 = vmatpush1.msra.mxu0 0.0
  %486 = vmatprep.subr.mxu0 0.0
  %487 = vmatpush1.msra.mxu0 0.0
  %488 = vmatprep.subr.mxu0 0.0
  %489 = vmatpush1.msra.mxu0 0.0
  %490 = vmatprep.subr.mxu0 0.0
  %491 = vmatpush1.msra.mxu0 %v161
  %492 = vmatprep.subr.mxu0 0.0
  %493 = vmatpush1.msra.mxu0 %v160
  %494 = vmatprep.subr.mxu0 0.0
  %495 = vmatpush1.msra.mxu0 %v159
  %496 = vmatprep.subr.mxu0 0.0
  %497 = vmatpush1.msra.mxu0 %v158
  %498 = vmatprep.subr.mxu0 0.0
  %499 = vmatpush2.msra.mxu0 0.0
  %500 = vmatprep.subr.mxu0 0.0
  %501 = vmatpush2.msra.mxu0 0.0
  %502 = vmatprep.subr.mxu0 0.0
  %503 = vmatpush2.msra.mxu0 0.0
  %504 = vmatprep.subr.mxu0 0.0
  %505 = vmatpush2.msra.mxu0 0.0
  %506 = vmatprep.subr.mxu0 0.0
  %507 = vmatpush2.msra.mxu0 0.0
  %508 = vmatprep.subr.mxu0 0.0
  %509 = vmatpush2.msra.mxu0 0.0
  %510 = vmatprep.subr.mxu0 0.0
  %511 = vmatpush2.msra.mxu0 0.0
  %512 = vmatprep.subr.mxu0 0.0
  %513 = vmatpush2.msra.mxu0 0.0
  %514 = vmatprep.subr.mxu0 0.0
  %515 = vmatpush2.msra.mxu0 0.0
  %516 = vmatprep.subr.mxu0 0.0
  %517 = vmatpush2.msra.mxu0 0.0
  %518 = vmatprep.subr.mxu0 0.0
  %519 = vmatpush2.msra.mxu0 0.0
  %520 = vmatprep.subr.mxu0 0.0
  %521 = vmatpush2.msra.mxu0 0.0
  %522 = vmatprep.subr.mxu0 0.0
  %523 = vmatpush2.msra.mxu0 0.0
  %524 = vmatprep.subr.mxu0 0.0
  %525 = vmatpush2.msra.mxu0 0.0
  %526 = vmatprep.subr.mxu0 0.0
  %527 = vmatpush2.msra.mxu0 0.0
  %528 = vmatprep.subr.mxu0 0.0
  %529 = vmatpush2.msra.mxu0 0.0
  %530 = vmatprep.mubr.f32.mxu0 0.0
  %531 = vmatmul.mubr.f32.gmra.mxu0 %v464
  %v532 = vpop.f32.mrf.mxu0
  %v533 = vadd.f32 0.0, %v532
  %v534 = vpop.f32.mrf.mxu0
  %535 = vdwg.mxu0
  %v536 = vadd.f32 %v140, %v533
  %v537 = vtanh.pop %v536
  %v539 = vsel %vm162, %v537, 0
  %541 = vmatprep.subr.mxu0 0.0
  %542 = vmatpush1.msra.mxu0 0.0
  %543 = vmatprep.subr.mxu0 0.0
  %544 = vmatpush1.msra.mxu0 0.0
  %545 = vmatprep.subr.mxu0 0.0
  %546 = vmatpush1.msra.mxu0 0.0
  %547 = vmatprep.subr.mxu0 0.0
  %548 = vmatpush1.msra.mxu0 0.0
  %549 = vmatprep.subr.mxu0 0.0
  %550 = vmatpush1.msra.mxu0 0.0
  %551 = vmatprep.subr.mxu0 0.0
  %552 = vmatpush1.msra.mxu0 0.0
  %553 = vmatprep.subr.mxu0 0.0
  %554 = vmatpush1.msra.mxu0 0.0
  %555 = vmatprep.subr.mxu0 0.0
  %556 = vmatpush1.msra.mxu0 0.0
  %557 = vmatprep.subr.mxu0 0.0
  %558 = vmatpush1.msra.mxu0 0.0
  %559 = vmatprep.subr.mxu0 0.0
  %560 = vmatpush1.msra.mxu0 0.0
  %561 = vmatprep.subr.mxu0 0.0
  %562 = vmatpush1.msra.mxu0 0.0
  %563 = vmatprep.subr.mxu0 0.0
  %564 = vmatpush1.msra.mxu0 0.0
  %565 = vmatprep.subr.mxu0 0.0
  %566 = vmatpush1.msra.mxu0 %v161
  %567 = vmatprep.subr.mxu0 0.0
  %568 = vmatpush1.msra.mxu0 %v160
  %569 = vmatprep.subr.mxu0 0.0
  %570 = vmatpush1.msra.mxu0 %v159
  %571 = vmatprep.subr.mxu0 0.0
  %572 = vmatpush1.msra.mxu0 %v158
  %573 = vmatprep.subr.mxu0 0.0
  %574 = vmatpush2.msra.mxu0 0.0
  %575 = vmatprep.subr.mxu0 0.0
  %576 = vmatpush2.msra.mxu0 0.0
  %577 = vmatprep.subr.mxu0 0.0
  %578 = vmatpush2.msra.mxu0 0.0
  %579 = vmatprep.subr.mxu0 0.0
  %580 = vmatpush2.msra.mxu0 0.0
  %581 = vmatprep.subr.mxu0 0.0
  %582 = vmatpush2.msra.mxu0 0.0
  %583 = vmatprep.subr.mxu0 0.0
  %584 = vmatpush2.msra.mxu0 0.0
  %585 = vmatprep.subr.mxu0 0.0
  %586 = vmatpush2.msra.mxu0 0.0
  %587 = vmatprep.subr.mxu0 0.0
  %588 = vmatpush2.msra.mxu0 0.0
  %589 = vmatprep.subr.mxu0 0.0
  %590 = vmatpush2.msra.mxu0 0.0
  %591 = vmatprep.subr.mxu0 0.0
  %592 = vmatpush2.msra.mxu0 0.0
  %593 = vmatprep.subr.mxu0 0.0
  %594 = vmatpush2.msra.mxu0 0.0
  %595 = vmatprep.subr.mxu0 0.0
  %596 = vmatpush2.msra.mxu0 0.0
  %597 = vmatprep.subr.mxu0 0.0
  %598 = vmatpush2.msra.mxu0 0.0
  %599 = vmatprep.subr.mxu0 0.0
  %600 = vmatpush2.msra.mxu0 0.0
  %601 = vmatprep.subr.mxu0 0.0
  %602 = vmatpush2.msra.mxu0 0.0
  %603 = vmatprep.subr.mxu0 0.0
  %604 = vmatpush2.msra.mxu0 0.0
  %605 = vmatprep.mubr.f32.mxu0 0.0
  %606 = vmatmul.mubr.f32.gmra.mxu0 %v539
  %v607 = vpop.f32.mrf.mxu0
  %v608 = vadd.f32 0.0, %v607
  %v609 = vpop.f32.mrf.mxu0
  %610 = vdwg.mxu0
  %v611 = vadd.f32 %v145, %v608
  %v612 = vtanh.pop %v611
  %v614 = vsel %vm162, %v612, 0
  %616 = vmatprep.subr.mxu0 0.0
  %617 = vmatpush1.msra.mxu0 0.0
  %618 = vmatprep.subr.mxu0 0.0
  %619 = vmatpush1.msra.mxu0 0.0
  %620 = vmatprep.subr.mxu0 0.0
  %621 = vmatpush1.msra.mxu0 0.0
  %622 = vmatprep.subr.mxu0 0.0
  %623 = vmatpush1.msra.mxu0 0.0
  %624 = vmatprep.subr.mxu0 0.0
  %625 = vmatpush1.msra.mxu0 0.0
  %626 = vmatprep.subr.mxu0 0.0
  %627 = vmatpush1.msra.mxu0 0.0
  %628 = vmatprep.subr.mxu0 0.0
  %629 = vmatpush1.msra.mxu0 0.0
  %630 = vmatprep.subr.mxu0 0.0
  %631 = vmatpush1.msra.mxu0 0.0
  %632 = vmatprep.subr.mxu0 0.0
  %633 = vmatpush1.msra.mxu0 0.0
  %634 = vmatprep.subr.mxu0 0.0
  %635 = vmatpush1.msra.mxu0 0.0
  %636 = vmatprep.subr.mxu0 0.0
  %637 = vmatpush1.msra.mxu0 0.0
  %638 = vmatprep.subr.mxu0 0.0
  %639 = vmatpush1.msra.mxu0 0.0
  %640 = vmatprep.subr.mxu0 0.0
  %641 = vmatpush1.msra.mxu0 %v161
  %642 = vmatprep.subr.mxu0 0.0
  %643 = vmatpush1.msra.mxu0 %v160
  %644 = vmatprep.subr.mxu0 0.0
  %645 = vmatpush1.msra.mxu0 %v159
  %646 = vmatprep.subr.mxu0 0.0
  %647 = vmatpush1.msra.mxu0 %v158
  %648 = vmatprep.subr.mxu0 0.0
  %649 = vmatpush2.msra.mxu0 0.0
  %650 = vmatprep.subr.mxu0 0.0
  %651 = vmatpush2.msra.mxu0 0.0
  %652 = vmatprep.subr.mxu0 0.0
  %653 = vmatpush2.msra.mxu0 0.0
  %654 = vmatprep.subr.mxu0 0.0
  %655 = vmatpush2.msra.mxu0 0.0
  %656 = vmatprep.subr.mxu0 0.0
  %657 = vmatpush2.msra.mxu0 0.0
  %658 = vmatprep.subr.mxu0 0.0
  %659 = vmatpush2.msra.mxu0 0.0
  %660 = vmatprep.subr.mxu0 0.0
  %661 = vmatpush2.msra.mxu0 0.0
  %662 = vmatprep.subr.mxu0 0.0
  %663 = vmatpush2.msra.mxu0 0.0
  %664 = vmatprep.subr.mxu0 0.0
  %665 = vmatpush2.msra.mxu0 0.0
  %666 = vmatprep.subr.mxu0 0.0
  %667 = vmatpush2.msra.mxu0 0.0
  %668 = vmatprep.subr.mxu0 0.0
  %669 = vmatpush2.msra.mxu0 0.0
  %670 = vmatprep.subr.mxu0 0.0
  %671 = vmatpush2.msra.mxu0 0.0
  %672 = vmatprep.subr.mxu0 0.0
  %673 = vmatpush2.msra.mxu0 0.0
  %674 = vmatprep.subr.mxu0 0.0
  %675 = vmatpush2.msra.mxu0 0.0
  %676 = vmatprep.subr.mxu0 0.0
  %677 = vmatpush2.msra.mxu0 0.0
  %678 = vmatprep.subr.mxu0 0.0
  %679 = vmatpush2.msra.mxu0 0.0
  %680 = vmatprep.mubr.f32.mxu0 0.0
  %681 = vmatmul.mubr.f32.gmra.mxu0 %v614
  %v682 = vpop.f32.mrf.mxu0
  %v683 = vadd.f32 0.0, %v682
  %v684 = vpop.f32.mrf.mxu0
  %685 = vdwg.mxu0
  %v686 = vadd.f32 %v150, %v683
  %v687 = vtanh.pop %v686
  %v689 = vsel %vm162, %v687, 0
  %691 = vmatprep.subr.mxu0 0.0
  %692 = vmatpush1.msra.mxu0 0.0
  %693 = vmatprep.subr.mxu0 0.0
  %694 = vmatpush1.msra.mxu0 0.0
  %695 = vmatprep.subr.mxu0 0.0
  %696 = vmatpush1.msra.mxu0 0.0
  %697 = vmatprep.subr.mxu0 0.0
  %698 = vmatpush1.msra.mxu0 0.0
  %699 = vmatprep.subr.mxu0 0.0
  %700 = vmatpush1.msra.mxu0 0.0
  %701 = vmatprep.subr.mxu0 0.0
  %702 = vmatpush1.msra.mxu0 0.0
  %703 = vmatprep.subr.mxu0 0.0
  %704 = vmatpush1.msra.mxu0 0.0
  %705 = vmatprep.subr.mxu0 0.0
  %706 = vmatpush1.msra.mxu0 0.0
  %707 = vmatprep.subr.mxu0 0.0
  %708 = vmatpush1.msra.mxu0 0.0
  %709 = vmatprep.subr.mxu0 0.0
  %710 = vmatpush1.msra.mxu0 0.0
  %711 = vmatprep.subr.mxu0 0.0
  %712 = vmatpush1.msra.mxu0 0.0
  %713 = vmatprep.subr.mxu0 0.0
  %714 = vmatpush1.msra.mxu0 0.0
  %715 = vmatprep.subr.mxu0 0.0
  %716 = vmatpush1.msra.mxu0 %v161
  %717 = vmatprep.subr.mxu0 0.0
  %718 = vmatpush1.msra.mxu0 %v160
  %719 = vmatprep.subr.mxu0 0.0
  %720 = vmatpush1.msra.mxu0 %v159
  %721 = vmatprep.subr.mxu0 0.0
  %722 = vmatpush1.msra.mxu0 %v158
  %723 = vmatprep.subr.mxu0 0.0
  %724 = vmatpush2.msra.mxu0 0.0
  %725 = vmatprep.subr.mxu0 0.0
  %726 = vmatpush2.msra.mxu0 0.0
  %727 = vmatprep.subr.mxu0 0.0
  %728 = vmatpush2.msra.mxu0 0.0
  %729 = vmatprep.subr.mxu0 0.0
  %730 = vmatpush2.msra.mxu0 0.0
  %731 = vmatprep.subr.mxu0 0.0
  %732 = vmatpush2.msra.mxu0 0.0
  %733 = vmatprep.subr.mxu0 0.0
  %734 = vmatpush2.msra.mxu0 0.0
  %735 = vmatprep.subr.mxu0 0.0
  %736 = vmatpush2.msra.mxu0 0.0
  %737 = vmatprep.subr.mxu0 0.0
  %738 = vmatpush2.msra.mxu0 0.0
  %739 = vmatprep.subr.mxu0 0.0
  %740 = vmatpush2.msra.mxu0 0.0
  %741 = vmatprep.subr.mxu0 0.0
  %742 = vmatpush2.msra.mxu0 0.0
  %743 = vmatprep.subr.mxu0 0.0
  %744 = vmatpush2.msra.mxu0 0.0
  %745 = vmatprep.subr.mxu0 0.0
  %746 = vmatpush2.msra.mxu0 0.0
  %747 = vmatprep.subr.mxu0 0.0
  %748 = vmatpush2.msra.mxu0 0.0
  %749 = vmatprep.subr.mxu0 0.0
  %750 = vmatpush2.msra.mxu0 0.0
  %751 = vmatprep.subr.mxu0 0.0
  %752 = vmatpush2.msra.mxu0 0.0
  %753 = vmatprep.subr.mxu0 0.0
  %754 = vmatpush2.msra.mxu0 0.0
  %755 = vmatprep.mubr.f32.mxu0 0.0
  %756 = vmatmul.mubr.f32.gmra.mxu0 %v689
  %v757 = vpop.f32.mrf.mxu0
  %v758 = vadd.f32 0.0, %v757
  %v759 = vpop.f32.mrf.mxu0
  %760 = vdwg.mxu0
  %v761 = vadd.f32 %v155, %v758
  %v762 = vtanh.pop %v761
  %v763 = vld [vmem:[%s2] sm:$0xff]
  %v764 = vld [vmem:[%s2 + $0x8] sm:$0xff]
  %v765 = vld [vmem:[%s2 + $0x10] sm:$0xff]
  %v766 = vld [vmem:[%s2 + $0x18] sm:$0xff]
  %v767 = vld [vmem:[%s2 + $0x20] sm:$0x1]
  %v768 = vlaneseq
  %v769 = vshrl.u32 %v768, 7
  %v770 = vsub.s32 0, %v769
  %v771 = vrot.slane %v767, %v770
  %v773 = vsel %vm162, %v762, 0
  %775 = vmatprep.subr.mxu0 0.0
  %776 = vmatpush1.msra.mxu0 0.0
  %777 = vmatprep.subr.mxu0 0.0
  %778 = vmatpush1.msra.mxu0 0.0
  %779 = vmatprep.subr.mxu0 0.0
  %780 = vmatpush1.msra.mxu0 0.0
  %781 = vmatprep.subr.mxu0 0.0
  %782 = vmatpush1.msra.mxu0 0.0
  %783 = vmatprep.subr.mxu0 0.0
  %784 = vmatpush1.msra.mxu0 0.0
  %785 = vmatprep.subr.mxu0 0.0
  %786 = vmatpush1.msra.mxu0 0.0
  %787 = vmatprep.subr.mxu0 0.0
  %788 = vmatpush1.msra.mxu0 0.0
  %789 = vmatprep.subr.mxu0 0.0
  %790 = vmatpush1.msra.mxu0 0.0
  %791 = vmatprep.subr.mxu0 0.0
  %792 = vmatpush1.msra.mxu0 0.0
  %793 = vmatprep.subr.mxu0 0.0
  %794 = vmatpush1.msra.mxu0 0.0
  %795 = vmatprep.subr.mxu0 0.0
  %796 = vmatpush1.msra.mxu0 0.0
  %797 = vmatprep.subr.mxu0 0.0
  %798 = vmatpush1.msra.mxu0 0.0
  %799 = vmatprep.subr.mxu0 0.0
  %800 = vmatpush1.msra.mxu0 %v766
  %801 = vmatprep.subr.mxu0 0.0
  %802 = vmatpush1.msra.mxu0 %v765
  %803 = vmatprep.subr.mxu0 0.0
  %804 = vmatpush1.msra.mxu0 %v764
  %805 = vmatprep.subr.mxu0 0.0
  %806 = vmatpush1.msra.mxu0 %v763
  %807 = vmatprep.subr.mxu0 0.0
  %808 = vmatpush2.msra.mxu0 0.0
  %809 = vmatprep.subr.mxu0 0.0
  %810 = vmatpush2.msra.mxu0 0.0
  %811 = vmatprep.subr.mxu0 0.0
  %812 = vmatpush2.msra.mxu0 0.0
  %813 = vmatprep.subr.mxu0 0.0
  %814 = vmatpush2.msra.mxu0 0.0
  %815 = vmatprep.subr.mxu0 0.0
  %816 = vmatpush2.msra.mxu0 0.0
  %817 = vmatprep.subr.mxu0 0.0
  %818 = vmatpush2.msra.mxu0 0.0
  %819 = vmatprep.subr.mxu0 0.0
  %820 = vmatpush2.msra.mxu0 0.0
  %821 = vmatprep.subr.mxu0 0.0
  %822 = vmatpush2.msra.mxu0 0.0
  %823 = vmatprep.subr.mxu0 0.0
  %824 = vmatpush2.msra.mxu0 0.0
  %825 = vmatprep.subr.mxu0 0.0
  %826 = vmatpush2.msra.mxu0 0.0
  %827 = vmatprep.subr.mxu0 0.0
  %828 = vmatpush2.msra.mxu0 0.0
  %829 = vmatprep.subr.mxu0 0.0
  %830 = vmatpush2.msra.mxu0 0.0
  %831 = vmatprep.subr.mxu0 0.0
  %832 = vmatpush2.msra.mxu0 0.0
  %833 = vmatprep.subr.mxu0 0.0
  %834 = vmatpush2.msra.mxu0 0.0
  %835 = vmatprep.subr.mxu0 0.0
  %836 = vmatpush2.msra.mxu0 0.0
  %837 = vmatprep.subr.mxu0 0.0
  %838 = vmatpush2.msra.mxu0 0.0
  %839 = vmatprep.mubr.f32.mxu0 0.0
  %840 = vmatmul.mubr.f32.gmra.mxu0 %v773
  %v841 = vpop.f32.mrf.mxu0
  %v842 = vadd.f32 %v771, %v841
  %v843 = vpop.f32.mrf.mxu0
  %844 = vdwg.mxu0
  %v845 = vsel %vm28, %v842, -inf
  %846 = vmax.xlane.f32.xlu0 %v845
  %v847 = vpop.xlane.xlu0 %846
  %v848 = vsub.f32 %v842, %v847
  %v849 = vmul.f32 %v848, 1.442695
  %v850 = vpow.pop %v849
  %v851 = vsel %vm28, %v850, 0.0
  %852 = vadd.xlane.f32.xlu0 %v851
  %v853 = vpop.xlane.xlu0 %852
  %v854 = vlog2.pop %v853
  %v855 = vmul.f32 %v854, 0.6931472
  %v856 = vsub.f32 %v848, %v855
  %857 = vst.msk [vmem:[%s3] sm:$0xff] %vm28, %v856
  // Predicated region
  $region14: #{char_rnn_forward.1} parent=0 // pred_check
    _
  $region15: #{char_rnn_forward.1} parent=0 // pred_check_branch
    %859 = sbr.rel (0) target = $region17
  $region16: #{char_rnn_forward.1} parent=0 // pred_region
    _
  $region17: #{char_rnn_forward.1} parent=0 // pred_fallthru
    _
  // Predicated region
  $region18: #{char_rnn_forward.1} parent=0 // pred_check
    _
  $region19: #{char_rnn_forward.1} parent=0 // pred_check_branch
    %861 = sbr.rel (0) target = $region21
  $region20: #{char_rnn_forward.1} parent=0 // pred_region
    _
  $region21: #{char_rnn_forward.1} parent=0 // pred_fallthru
    _

</llo_original>
